<compile_context>
chip_gen: v6e
topology: v6e:2x2x1
jax: 0.10.0
libtpu: 0.0.40
codegen_flags: <defaults>
</compile_context>

<pallas_src>
import jax
import jax.numpy as jnp
from jax.experimental import pallas as pl
from jax.experimental.pallas import tpu as pltpu

NCLASSES = 3
LANE = 128
SUBLANE = 8
NEG_BIG = -1e30            # padded-class bias -> exp() underflows to exactly 0
_VMEM_BUDGET = 24 << 20    # resident-buffer target (safe on v7x's 64 MiB VMEM)
_TN_MAX = 4096             # row-tile cap (v6e can go big; budget caps v7x/v5e)
_TK_SPLIT = 1024           # feature-axis tile when D is split


def _round_up(v, m):
    return ((v + m - 1) // m) * m


def _logreg_kernel(x_ref, w_ref, b_ref, o_ref, acc_ref):
    """grid = (row tiles ["parallel"], feature tiles ["arbitrary" reduction])."""
    k = pl.program_id(1)

    @pl.when(k == 0)
    def _init():
        acc_ref[...] = jnp.zeros_like(acc_ref)

    # MXU matmul with f32 accumulation (inputs may be f32 or bf16).
    acc_ref[...] += jnp.dot(x_ref[...], w_ref[...],
                            preferred_element_type=jnp.float32)

    @pl.when(k == pl.num_programs(1) - 1)
    def _finalize():
        scores = acc_ref[...] + b_ref[...]          # (tn, c_pad) + (1, c_pad)
        # Numerically stable softmax over the class axis (dim=1 in PyTorch).
        # Padded classes carry a -1e30 bias, so exp(...) underflows to 0 and
        # they never contribute to the denominator.  Exact divide (the approx
        # reciprocal was the source of the previous accuracy failure).
        m = jnp.max(scores, axis=-1, keepdims=True)
        e = jnp.exp(scores - m)
        denom = jnp.sum(e, axis=-1, keepdims=True)
        o_ref[...] = (e / denom).astype(o_ref.dtype)


def _pick_tiles(n, d, c_pad, x_bytes, w_bytes, out_bytes, row_tile, k_tile):
    """Largest row tile whose FULL resident footprint fits the VMEM budget."""
    bias_bytes = 2 * c_pad * 4

    def row_tile_for(tk):
        avail = _VMEM_BUDGET - 2 * tk * c_pad * w_bytes - bias_bytes
        per_row = 2 * tk * x_bytes + 2 * c_pad * out_bytes + c_pad * 4
        return max(SUBLANE, (max(0, avail) // per_row) // SUBLANE * SUBLANE)

    # Feature (K) tile: use full D unless that would force a tiny row tile.
    if k_tile is not None:
        tk = int(k_tile)
    else:
        tk = d
        if d > _TK_SPLIT and row_tile_for(d) < 256:
            tk = _TK_SPLIT
            # Prefer a lane-multiple divisor of D so X needs no column padding.
            t = tk
            while t >= LANE and d % t != 0:
                t -= LANE
            if t >= LANE:
                tk = t
    if tk != d and tk % LANE != 0:
        raise ValueError("k_tile must be a multiple of 128 (or equal to D)")

    # Row tile.
    if row_tile is not None:
        tn = int(row_tile)
    else:
        tn = min(row_tile_for(tk), _TN_MAX)
        # >= 4 grid steps when N allows it so the "parallel" row axis can be
        # sharded across v7x's two TensorCores (and the DMA pipeline has depth).
        tn = min(tn, max(SUBLANE, _round_up(pl.cdiv(n, 4), SUBLANE)))
        tn = max(SUBLANE, tn // SUBLANE * SUBLANE)
    if tn % SUBLANE != 0:
        raise ValueError("row_tile must be a multiple of 8")

    footprint = (2 * tn * tk * x_bytes + 2 * tk * c_pad * w_bytes
                 + 2 * tn * c_pad * out_bytes + tn * c_pad * 4 + bias_bytes)
    return tn, tk, footprint


def pt_logreg_forward(x, w, b, *, row_tile=None, k_tile=None,
                      stream_dtype=None, out_dtype=jnp.float32,
                      return_padded=False):
    """Pallas implementation of PTLogreg.forward.

    x: (N, D), w: (D, C), b: (C,)  ->  (N, C) softmax probabilities.

    stream_dtype: optional narrower dtype (e.g. jnp.bfloat16) used to stream
      X/W (accumulation stays f32).  Accuracy tradeoff — opt-in.
    out_dtype: dtype of the returned probabilities (bf16 halves write traffic).
    return_padded: if True, return the lane-dense (N, 128) slab directly
      (padded classes have probability exactly 0) and skip the re-slice.
    """
    n, d = x.shape
    d2, c = w.shape
    assert d == d2, f"feature dims disagree: {d} vs {d2}"

    compute_dtype = (jnp.dtype(stream_dtype) if stream_dtype is not None
                     else jnp.dtype(jnp.float32))
    out_dtype = jnp.dtype(out_dtype)
    x_bytes = compute_dtype.itemsize
    w_bytes = compute_dtype.itemsize
    out_bytes = out_dtype.itemsize

    # Lane-dense class dimension (multiple of 128) -> full-width vst stores.
    c_pad = _round_up(max(c, LANE), LANE)

    tn, tk, footprint = _pick_tiles(n, d, c_pad, x_bytes, w_bytes, out_bytes,
                                    row_tile, k_tile)

    # Pad the feature axis only if the chosen K tile does not divide D
    # (zero X columns against zero W rows add nothing to the accumulator).
    d_pad = _round_up(d, tk) if tk != d else d

    x_p = x.astype(compute_dtype) if x.dtype != compute_dtype else x
    if d_pad != d:
        x_p = jnp.pad(x_p, ((0, 0), (0, d_pad - d)))

    w_p = jnp.zeros((d_pad, c_pad), compute_dtype).at[:d, :c].set(
        w.astype(compute_dtype))
    b_p = jnp.full((1, c_pad), NEG_BIG, jnp.float32).at[0, :c].set(
        b.astype(jnp.float32))

    grid = (pl.cdiv(n, tn), d_pad // tk)

    cost = pl.CostEstimate(
        flops=2 * n * d_pad * c_pad,
        transcendentals=n * c_pad,
        bytes_accessed=(n * d_pad * x_bytes + d_pad * c_pad * w_bytes
                        + c_pad * 4 + n * c_pad * out_bytes))

    vmem_limit = int(min(64 << 20, max(16 << 20, footprint + (footprint >> 1))))

    out = pl.pallas_call(
        _logreg_kernel,
        out_shape=jax.ShapeDtypeStruct((n, c_pad), out_dtype),
        grid=grid,
        in_specs=[
            # X tile; last row block may be ragged (garbage rows are harmless).
            pl.BlockSpec((tn, tk), lambda i, k: (i, k)),
            # W K-slab (invariant in i; only refetched when k changes).
            # TODO(synk): single-buffer W/b via pipeline_mode=pl.Buffered(1)
            # once confirmed supported for top-level pallas_call specs.
            pl.BlockSpec((tk, c_pad), lambda i, k: (k, 0)),
            # Padded bias row (constant -> fetched once).
            pl.BlockSpec((1, c_pad), lambda i, k: (0, 0)),
        ],
        out_specs=pl.BlockSpec((tn, c_pad), lambda i, k: (i, 0)),
        scratch_shapes=[pltpu.VMEM((tn, c_pad), jnp.float32)],
        compiler_params=pltpu.CompilerParams(
            dimension_semantics=("parallel", "arbitrary"),
            vmem_limit_bytes=vmem_limit),
        cost_estimate=cost,
    )(x_p, w_p, b_p)

    if return_padded:
        return out
    # TODO(synk): for consumers that only need argmax / NLL, fuse them into the
    # kernel so only a narrow result leaves HBM instead of the (N, 128) slab.
    return out[:, :c]


if __name__ == "__main__":
    key = jax.random.PRNGKey(0)
    kx, kw, kb, kx2, kx3, kw3 = jax.random.split(key, 6)

    def ref_fwd(xx, ww, bb):
        scores = jnp.dot(xx, ww, precision=jax.lax.Precision.HIGHEST) + bb
        return jax.nn.softmax(scores, axis=1)

    # Small shapes consistent with the module: N examples, D features, 3 classes.
    N, D, C = 8, 32, NCLASSES
    x = jax.random.normal(kx, (N, D), dtype=jnp.float32)
    w = jax.random.normal(kw, (D, C), dtype=jnp.float32)
    b = jax.random.normal(kb, (C,), dtype=jnp.float32)

    probs = jax.block_until_ready(pt_logreg_forward(x, w, b))
    ref = ref_fwd(x, w, b)
    assert probs.shape == (N, C)
    # 2e-3 tolerance covers MXU f32 multi-pass rounding on hardware.
    assert jnp.allclose(probs, ref, atol=2e-3, rtol=2e-3)
    assert jnp.allclose(jnp.sum(probs, axis=1), 1.0, atol=1e-4)

    # Ragged multi-step row grid (no host-side padding copy of X).
    N2 = 2051  # not a multiple of 8 or of the row tile
    x2 = jax.random.normal(kx2, (N2, D), dtype=jnp.float32)
    probs2 = jax.block_until_ready(pt_logreg_forward(x2, w, b, row_tile=512))
    assert probs2.shape == (N2, C)
    assert jnp.allclose(probs2, ref_fwd(x2, w, b), atol=2e-3, rtol=2e-3)

    # K-split accumulator path (second "arbitrary" grid axis over features).
    N3, D3 = 300, 256
    x3 = jax.random.normal(kx3, (N3, D3), dtype=jnp.float32)
    w3 = jax.random.normal(kw3, (D3, C), dtype=jnp.float32)
    probs3 = jax.block_until_ready(
        pt_logreg_forward(x3, w3, b, row_tile=128, k_tile=128))
    assert probs3.shape == (N3, C)
    assert jnp.allclose(probs3, ref_fwd(x3, w3, b), atol=2e-3, rtol=2e-3)

    # Opt-in bf16 streaming of X/W (halves HBM read traffic; looser tolerance).
    probs_bf16 = jax.block_until_ready(
        pt_logreg_forward(x, w, b, stream_dtype=jnp.bfloat16))
    assert probs_bf16.shape == (N, C)
    assert jnp.allclose(probs_bf16, ref, atol=5e-2, rtol=1e-1)
    assert jnp.allclose(jnp.sum(probs_bf16, axis=1), 1.0, atol=1e-3)

    print("KERNEL_OK")
</pallas_src>

<mosaic_0001>
module attributes {stable_mosaic.version = 11 : i64} {
  func.func @_logreg_kernel(%arg0: i32, %arg1: i32, %arg2: memref<8x32xf32, #tpu.memory_space<vmem>>, %arg3: memref<32x128xf32, #tpu.memory_space<vmem>>, %arg4: memref<1x128xf32, #tpu.memory_space<vmem>>, %arg5: memref<8x128xf32, #tpu.memory_space<vmem>>, %arg6: memref<8x128xf32, #tpu.memory_space<vmem>>) attributes {dimension_semantics = [#tpu.dimension_semantics<parallel>, #tpu.dimension_semantics<arbitrary>], iteration_bounds = array<i64: 1, 1>, scalar_prefetch = 0 : i64, scratch_operands = 1 : i64, tpu.core_type = #tpu.core_type<tc>, window_params = [{transform_indices = @transform_0, window_bounds = array<i64: 8, 32>}, {transform_indices = @transform_1, window_bounds = array<i64: 32, 128>}, {pipeline_mode = #tpu.pipeline_mode<synchronous>, transform_indices = @transform_2, window_bounds = array<i64: 1, 128>}, {transform_indices = @transform_3, window_bounds = array<i64: 8, 128>}]} {
    %c0_i32 = arith.constant 0 : i32
    %0 = arith.cmpi eq, %arg1, %c0_i32 : i32
    %1 = arith.extui %0 : i1 to i32
    %c0_i32_0 = arith.constant 0 : i32
    %2 = arith.cmpi ne, %1, %c0_i32_0 : i32
    scf.if %2 {
      %cst_10 = arith.constant 0.000000e+00 : f32
      %12 = vector.broadcast %cst_10 : f32 to vector<8x128xf32>
      %c0_11 = arith.constant 0 : index
      %c0_12 = arith.constant 0 : index
      %13 = vector.load %arg6[%c0_11, %c0_12] : memref<8x128xf32, #tpu.memory_space<vmem>>, vector<8x128xf32>
      tpu.vector_store %arg6[%c0_11, %c0_12], %12 {strides = array<i32>} : memref<8x128xf32, #tpu.memory_space<vmem>>, vector<8x128xf32>,
    } else {
    }
    %c0 = arith.constant 0 : index
    %c0_1 = arith.constant 0 : index
    %3 = vector.load %arg6[%c0, %c0_1] : memref<8x128xf32, #tpu.memory_space<vmem>>, vector<8x128xf32>
    %c0_2 = arith.constant 0 : index
    %c0_3 = arith.constant 0 : index
    %4 = vector.load %arg2[%c0_2, %c0_3] : memref<8x32xf32, #tpu.memory_space<vmem>>, vector<8x32xf32>
    %c0_4 = arith.constant 0 : index
    %c0_5 = arith.constant 0 : index
    %5 = vector.load %arg3[%c0_4, %c0_5] : memref<32x128xf32, #tpu.memory_space<vmem>>, vector<32x128xf32>
    %cst = arith.constant dense<0.000000e+00> : vector<8x128xf32>
    %6 = tpu.matmul %4, %5, %cst {dimension_numbers = #tpu.dot_dimension_numbers<[1], [0], [0], [1], [0, 0, 1, 1], [], []>} : vector<8x32xf32>, vector<32x128xf32>, vector<8x128xf32> -> vector<8x128xf32>
    %7 = arith.addf %3, %6 : vector<8x128xf32>
    %c0_6 = arith.constant 0 : index
    %c0_7 = arith.constant 0 : index
    %8 = vector.load %arg6[%c0_6, %c0_7] : memref<8x128xf32, #tpu.memory_space<vmem>>, vector<8x128xf32>
    tpu.vector_store %arg6[%c0_6, %c0_7], %7 {strides = array<i32>} : memref<8x128xf32, #tpu.memory_space<vmem>>, vector<8x128xf32>,
    %c0_i32_8 = arith.constant 0 : i32
    %9 = arith.cmpi eq, %arg1, %c0_i32_8 : i32
    %10 = arith.extui %9 : i1 to i32
    %c0_i32_9 = arith.constant 0 : i32
    %11 = arith.cmpi ne, %10, %c0_i32_9 : i32
    scf.if %11 {
      %c0_10 = arith.constant 0 : index
      %c0_11 = arith.constant 0 : index
      %12 = vector.load %arg6[%c0_10, %c0_11] : memref<8x128xf32, #tpu.memory_space<vmem>>, vector<8x128xf32>
      %c0_12 = arith.constant 0 : index
      %c0_13 = arith.constant 0 : index
      %13 = vector.load %arg4[%c0_12, %c0_13] : memref<1x128xf32, #tpu.memory_space<vmem>>, vector<1x128xf32>
      %14 = vector.broadcast %13 : vector<1x128xf32> to vector<8x128xf32>
      %15 = arith.addf %12, %14 : vector<8x128xf32>
      %cst_14 = arith.constant dense<0xFF800000> : vector<8xf32>
      %16 = vector.multi_reduction <maximumf>, %15, %cst_14 [1] : vector<8x128xf32> to vector<8xf32>
      %17 = vector.shape_cast %16 : vector<8xf32> to vector<8x1xf32>
      %18 = vector.broadcast %17 : vector<8x1xf32> to vector<8x128xf32>
      %19 = arith.subf %15, %18 : vector<8x128xf32>
      %20 = math.exp %19 : vector<8x128xf32>
      %cst_15 = arith.constant dense<0.000000e+00> : vector<8xf32>
      %21 = vector.multi_reduction <add>, %20, %cst_15 [1] : vector<8x128xf32> to vector<8xf32>
      %22 = vector.shape_cast %21 : vector<8xf32> to vector<8x1xf32>
      %23 = vector.broadcast %22 : vector<8x1xf32> to vector<8x128xf32>
      %24 = arith.divf %20, %23 : vector<8x128xf32>
      %c0_16 = arith.constant 0 : index
      %c0_17 = arith.constant 0 : index
      %25 = vector.load %arg5[%c0_16, %c0_17] : memref<8x128xf32, #tpu.memory_space<vmem>>, vector<8x128xf32>
      tpu.vector_store %arg5[%c0_16, %c0_17], %24 {strides = array<i32>} : memref<8x128xf32, #tpu.memory_space<vmem>>, vector<8x128xf32>,
    } else {
    }
    return
  }
  func.func @transform_0(%arg0: i32, %arg1: i32) -> (i32, i32) {
    %c0_i32 = arith.constant 0 : i32
    return %arg0, %arg1 : i32, i32
  }
  func.func @transform_1(%arg0: i32, %arg1: i32) -> (i32, i32) {
    %c0_i32 = arith.constant 0 : i32
    %c0_i32_0 = arith.constant 0 : i32
    return %arg1, %c0_i32 : i32, i32
  }
  func.func @transform_2(%arg0: i32, %arg1: i32) -> (i32, i32) {
    %c0_i32 = arith.constant 0 : i32
    %c0_i32_0 = arith.constant 0 : i32
    %c0_i32_1 = arith.constant 0 : i32
    return %c0_i32, %c0_i32_0 : i32, i32
  }
  func.func @transform_3(%arg0: i32, %arg1: i32) -> (i32, i32) {
    %c0_i32 = arith.constant 0 : i32
    %c0_i32_0 = arith.constant 0 : i32
    return %arg0, %c0_i32 : i32, i32
  }
}

</mosaic_0001>

<llo_original>
// kernel: tpu_custom_call.1
$region0: #{tpu_custom_call.1}
  #allocation0 [shape = 'u32[]', space=smem, size = 0x4, offset = 0x4, fixed_abs, tag = 'smem constant byte address 0x4 - core index']
  #allocation1 [shape = 'u32[144,128]{1,0:T(1,128)}', space=vmem, size = 0x12000, scoped, tag = 'internal scratch']
  #allocation2 [shape = 'f32[8,128]{1,0:T(8,128)}', space=vmem, size = 0x1000, scoped, tag = 'scratch operand']
  %s0 = inlined_call_operand.hbm [shape: f32[8,32], index: 0, kind: input, shape index: {}]
  %s1 = inlined_call_operand.hbm [shape: f32[32,128], index: 1, kind: input, shape index: {}]
  %s2 = inlined_call_operand.vmem [shape: f32[1,128], index: 2, kind: input, shape index: {}]
  %s3 = inlined_call_operand.hbm [shape: f32[8,128], index: 3, kind: output, shape index: {}]
  %s4 = sld [smem:[#allocation0]]
  $region38: #{tpu_custom_call.1} parent=0
    _
  %s6 = ssub.s32 1, %s4
  %s7 = scalar_select 0, %s6, %s4
  $region1: #{tpu_custom_call.1} parent=0
    #allocation3 [shape = 'u8[4096]{0}', space=vmem, size = 0x1000, scoped, tag = 'input window, operand 0, single buffered']
    #allocation4 [shape = 's32[1]{0}', space=sflag, size = 0x4, scoped, tag = 'scoped memory for tpu_custom_call.1']
    #allocation5 [shape = 's32[1]{0}', space=sflag, size = 0x4, scoped, tag = 'scoped memory for tpu_custom_call.1']
    #allocation6 [shape = 'u8[16384]{0}', space=vmem, size = 0x4000, scoped, tag = 'input window, operand 1, single buffered']
    #allocation7 [shape = 's32[1]{0}', space=sflag, size = 0x4, scoped, tag = 'scoped memory for tpu_custom_call.1']
    #allocation8 [shape = 'u8[4096]{0}', space=vmem, size = 0x1000, scoped, tag = 'output window, operand 0, single buffered']
    %8 = vsyncpa [#allocation4], 0
    %9 = vsyncpa [#allocation7], 0
    %10 = vsyncpa [#allocation5], 0
    // Predicated region
    $region2: #{tpu_custom_call.1} parent=1 // pred_check
      _
    $region3: #{tpu_custom_call.1} parent=1 // pred_check_branch
      %12 = sbr.rel (0) target = $region5
    $region4: #{tpu_custom_call.1} parent=1 // pred_region
      %s14 = ssub.s32 128, 128
      %15 = vsyncadd [#allocation4], %s14
      %s17 = sshll.u32 [#allocation3], 4
      %s18 = int_to_ptr.vmem [resolvable:$true] %s17
      %20 = dma.hbm_to_vmem [thread:$0]  %s0, 128, %s18, [#allocation4]
    $region5: #{tpu_custom_call.1} parent=1 // pred_fallthru
      _
    // Predicated region
    $region6: #{tpu_custom_call.1} parent=1 // pred_check
      _
    $region7: #{tpu_custom_call.1} parent=1 // pred_check_branch
      %22 = sbr.rel (0) target = $region9
    $region8: #{tpu_custom_call.1} parent=1 // pred_region
      %s24 = ssub.s32 512, 512
      %25 = vsyncadd [#allocation7], %s24
      %s26 = sshll.u32 [#allocation6], 4
      %s27 = int_to_ptr.vmem [resolvable:$true] %s26
      %32 = dma.hbm_to_vmem [thread:$0]  %s1, 512, %s27, [#allocation7], 128, 128, 8
    $region9: #{tpu_custom_call.1} parent=1 // pred_fallthru
      _
    // Predicated region
    $region10: #{tpu_custom_call.1} parent=1 // pred_check
      _
    $region11: #{tpu_custom_call.1} parent=1 // pred_check_branch
      %34 = sbr.rel (0) target = $region13
    $region12: #{tpu_custom_call.1} parent=1 // pred_region
      _
    $region13: #{tpu_custom_call.1} parent=1 // pred_fallthru
      _
    // Predicated region
    $region14: #{tpu_custom_call.1} parent=1 // pred_check
      _
    $region15: #{tpu_custom_call.1} parent=1 // pred_check_branch
      %36 = sbr.rel (0) target = $region17
    $region16: #{tpu_custom_call.1} parent=1 // pred_region
      %37 = dma.done [#allocation4], 128
    $region17: #{tpu_custom_call.1} parent=1 // pred_fallthru
      _
    // Predicated region
    $region18: #{tpu_custom_call.1} parent=1 // pred_check
      _
    $region19: #{tpu_custom_call.1} parent=1 // pred_check_branch
      %39 = sbr.rel (0) target = $region21
    $region20: #{tpu_custom_call.1} parent=1 // pred_region
      %40 = dma.done [#allocation7], 512
    $region21: #{tpu_custom_call.1} parent=1 // pred_fallthru
      _
    %p41 = scmp.eq.s32.totalorder 0, 0
    // Predicated region
    $region22: #{tpu_custom_call.1} parent=1 // pred_check
      %p42 = pneg %p41
    $region23: #{tpu_custom_call.1} parent=1 // pred_check_branch
      %44 = sbr.rel (%p42) target = $region25
    $region24: #{tpu_custom_call.1} parent=1 // pred_region
      %45 = vst [vmem:[#allocation2] sm:$0xff] 0.0
    $region25: #{tpu_custom_call.1} parent=1 // pred_fallthru
      _
    %v46 = vld [vmem:[#allocation2] sm:$0xff]
    %v47 = vld [vmem:[#allocation3] sm:$0xff]
    %v48 = vld [vmem:[#allocation6] sm:$0xff]
    %v49 = vld [vmem:[#allocation6 + $0x8] sm:$0xff]
    %v50 = vld [vmem:[#allocation6 + $0x10] sm:$0xff]
    %v51 = vld [vmem:[#allocation6 + $0x18] sm:$0xff]
    %vm52 = vcmask 261120
    %v54 = vsel %vm52, %v47, 0
    %56 = vmatprep.subr.mxu0 0.0
    %57 = vmatpush1.msra.mxu0 0.0
    %58 = vmatprep.subr.mxu0 0.0
    %59 = vmatpush1.msra.mxu0 0.0
    %60 = vmatprep.subr.mxu0 0.0
    %61 = vmatpush1.msra.mxu0 0.0
    %62 = vmatprep.subr.mxu0 0.0
    %63 = vmatpush1.msra.mxu0 0.0
    %64 = vmatprep.subr.mxu0 0.0
    %65 = vmatpush1.msra.mxu0 0.0
    %66 = vmatprep.subr.mxu0 0.0
    %67 = vmatpush1.msra.mxu0 0.0
    %68 = vmatprep.subr.mxu0 0.0
    %69 = vmatpush1.msra.mxu0 0.0
    %70 = vmatprep.subr.mxu0 0.0
    %71 = vmatpush1.msra.mxu0 0.0
    %72 = vmatprep.subr.mxu0 0.0
    %73 = vmatpush1.msra.mxu0 0.0
    %74 = vmatprep.subr.mxu0 0.0
    %75 = vmatpush1.msra.mxu0 0.0
    %76 = vmatprep.subr.mxu0 0.0
    %77 = vmatpush1.msra.mxu0 0.0
    %78 = vmatprep.subr.mxu0 0.0
    %79 = vmatpush1.msra.mxu0 0.0
    %80 = vmatprep.subr.mxu0 0.0
    %81 = vmatpush1.msra.mxu0 %v51
    %82 = vmatprep.subr.mxu0 0.0
    %83 = vmatpush1.msra.mxu0 %v50
    %84 = vmatprep.subr.mxu0 0.0
    %85 = vmatpush1.msra.mxu0 %v49
    %86 = vmatprep.subr.mxu0 0.0
    %87 = vmatpush1.msra.mxu0 %v48
    %88 = vmatprep.subr.mxu0 0.0
    %89 = vmatpush2.msra.mxu0 0.0
    %90 = vmatprep.subr.mxu0 0.0
    %91 = vmatpush2.msra.mxu0 0.0
    %92 = vmatprep.subr.mxu0 0.0
    %93 = vmatpush2.msra.mxu0 0.0
    %94 = vmatprep.subr.mxu0 0.0
    %95 = vmatpush2.msra.mxu0 0.0
    %96 = vmatprep.subr.mxu0 0.0
    %97 = vmatpush2.msra.mxu0 0.0
    %98 = vmatprep.subr.mxu0 0.0
    %99 = vmatpush2.msra.mxu0 0.0
    %100 = vmatprep.subr.mxu0 0.0
    %101 = vmatpush2.msra.mxu0 0.0
    %102 = vmatprep.subr.mxu0 0.0
    %103 = vmatpush2.msra.mxu0 0.0
    %104 = vmatprep.subr.mxu0 0.0
    %105 = vmatpush2.msra.mxu0 0.0
    %106 = vmatprep.subr.mxu0 0.0
    %107 = vmatpush2.msra.mxu0 0.0
    %108 = vmatprep.subr.mxu0 0.0
    %109 = vmatpush2.msra.mxu0 0.0
    %110 = vmatprep.subr.mxu0 0.0
    %111 = vmatpush2.msra.mxu0 0.0
    %112 = vmatprep.subr.mxu0 0.0
    %113 = vmatpush2.msra.mxu0 0.0
    %114 = vmatprep.subr.mxu0 0.0
    %115 = vmatpush2.msra.mxu0 0.0
    %116 = vmatprep.subr.mxu0 0.0
    %117 = vmatpush2.msra.mxu0 0.0
    %118 = vmatprep.subr.mxu0 0.0
    %119 = vmatpush2.msra.mxu0 0.0
    %120 = vmatprep.mubr.f32.mxu0 0.0
    %121 = vmatmul.mubr.f32.gmra.mxu0 %v54
    %v122 = vpop.f32.mrf.mxu0
    %v123 = vadd.f32 0.0, %v122
    %v124 = vpop.f32.mrf.mxu0
    %125 = vdwg.mxu0
    %v126 = vadd.f32 %v46, %v123
    %127 = vst [vmem:[#allocation2] sm:$0xff] %v126
    // Predicated region
    $region26: #{tpu_custom_call.1} parent=1 // pred_check
      %p128 = pneg %p41
    $region27: #{tpu_custom_call.1} parent=1 // pred_check_branch
      %130 = sbr.rel (%p128) target = $region29
    $region28: #{tpu_custom_call.1} parent=1 // pred_region
      %v131 = vld [vmem:[#allocation2] sm:$0xff]
      %v132 = vld [vmem:[%s2] sm:$0x1]
      %v134 = vlaneseq
      %v135 = vshrl.u32 %v134, 7
      %v136 = vsub.s32 0, %v135
      %v137 = vrot.slane %v132, %v136
      %v139 = vadd.f32 %v131, %v137
      %140 = vmax.xlane.f32.xlu0 %v139
      %v141 = vpop.xlane.xlu0 %140
      %v142 = vsub.f32 %v139, %v141
      %v143 = vmul.f32 %v142, 1.442695
      %v144 = vpow.pop %v143
      %145 = vadd.xlane.f32.xlu0 %v144
      %v146 = vpop.xlane.xlu0 %145
      %v147 = vrcp.pop %v146
      %v148 = vmul.f32 %v144, %v147
      %149 = vst [vmem:[#allocation8] sm:$0xff] %v148
    $region29: #{tpu_custom_call.1} parent=1 // pred_fallthru
      _
    // Predicated region
    $region30: #{tpu_custom_call.1} parent=1 // pred_check
      _
    $region31: #{tpu_custom_call.1} parent=1 // pred_check_branch
      %151 = sbr.rel (0) target = $region33
    $region32: #{tpu_custom_call.1} parent=1 // pred_region
      %s153 = ssub.s32 128, 128
      %154 = vsyncadd [#allocation5], %s153
      %s156 = sshll.u32 [#allocation8], 4
      %s157 = int_to_ptr.vmem [resolvable:$true] %s156
      %159 = dma.vmem_to_hbm [thread:$0]  %s157, 128, %s3, [#allocation5]
    $region33: #{tpu_custom_call.1} parent=1 // pred_fallthru
      _
    // Predicated region
    $region34: #{tpu_custom_call.1} parent=1 // pred_check
      _
    $region35: #{tpu_custom_call.1} parent=1 // pred_check_branch
      %161 = sbr.rel (0) target = $region37
    $region36: #{tpu_custom_call.1} parent=1 // pred_region
      %162 = dma.done [#allocation5], 128
    $region37: #{tpu_custom_call.1} parent=1 // pred_fallthru
      _
    %163 = vsyncpa [#allocation4], 1
    %164 = vsyncpa [#allocation7], 1
    %165 = vsyncpa [#allocation5], 1

</llo_original>
